<compile_context>
chip_gen: v5e
topology: v5e:2x2
jax: 0.10.0
libtpu: 0.0.40
codegen_flags: <defaults>
</compile_context>

<pallas_src>
import functools

import jax
import jax.numpy as jnp
from jax.experimental import pallas as pl
from jax.experimental.pallas import tpu as pltpu

# Keep wrapper-side fold and the pure-JAX reference in true float32 so the
# numerical comparison in __main__ is tight (TPU default matmul is bf16).
jax.config.update("jax_default_matmul_precision", "highest")


def _cdiv(a, b):
    return (a + b - 1) // b


def _round_up(v, m):
    return _cdiv(v, m) * m


def _vmem_capacity_bytes():
    """Physical VMEM of the current chip (fallback: v7x's 64 MiB floor)."""
    try:
        return int(pltpu.get_tpu_info().vmem_capacity_bytes)
    except Exception:
        return 64 * 1024 * 1024


def _choose_tile(B, F, block_b, vmem_bytes):
    """Pick the batch-tile size (pure Python ints, evaluated at trace time)."""
    # Per-tile-row VMEM cost: double-buffered x row + double-buffered
    # lane-padded (1 -> 128) output row.  Keep the tile under ~60% of physical
    # VMEM so weight buffers and compiler scratch always fit (v7x: 64 MiB,
    # v5e/v6e: 128 MiB) with comfortable headroom.
    per_row = 2 * F * 4 + 2 * 128 * 4
    max_tb = max(8, (int(vmem_bytes * 0.6) // per_row) // 8 * 8)
    block_b = max(8, min(block_b, max_tb) // 8 * 8)

    if B < 16:
        # One block covering the whole batch (block dim == array dim, so no
        # 8-alignment requirement).
        return B
    if B <= block_b:
        # Whole batch fits one tile: split into two equal tiles so both
        # TensorCores on a v7x chip get balanced work.
        return _round_up(_cdiv(B, 2), 8)

    tb = block_b
    nsteps = _cdiv(B, tb)
    # Nudge an odd step count to an even one for balanced dual-TC scheduling.
    if nsteps % 2 == 1 and nsteps < 128:
        tb_even = _round_up(_cdiv(B, nsteps + 1), 8)
        if tb_even >= 8 and _cdiv(B, tb_even) % 2 == 0:
            tb = tb_even
    return tb


def _affine_kernel(x_ref, w_ref, b_ref, o_ref):
    """One batch tile of y = x @ W_eff + b_eff.

    x_ref: (tb, F) VMEM   w_ref: (1, F) VMEM   b_ref: (1, 1) SMEM   o_ref: (tb, 1) VMEM
    Computed as an elementwise multiply (VPU) + cross-lane sum (XLU); the
    kernel stays purely memory-bound on the x read.
    """
    x = x_ref[...].astype(jnp.float32)            # (tb, F)
    w = w_ref[...].astype(jnp.float32)            # (1, F): broadcast over rows
    y = jnp.sum(x * w, axis=-1, keepdims=True)    # (tb, 1)
    o_ref[...] = (y + b_ref[0, 0]).astype(o_ref.dtype)


def _fold_affine(params):
    """Collapse the 5 Linear layers (dropout = identity) into (W_eff, b_eff)."""
    w1, b1, w2, b2, w3, b3, w4, b4, w5, b5 = params
    dot = functools.partial(jnp.dot, preferred_element_type=jnp.float32,
                            precision=jax.lax.Precision.HIGHEST)
    w = w1
    for wn in (w2, w3, w4, w5):
        w = dot(w, wn)
    b = b1
    for wn, bn in ((w2, b2), (w3, b3), (w4, b4), (w5, b5)):
        b = dot(b, wn) + bn
    # w: (F, 1) -> (1, F) row for in-kernel broadcast; b: (1, 1) SMEM scalar.
    return w.reshape(1, -1), b.reshape(1, 1)


@functools.partial(jax.jit, static_argnames=("block_b",))
def aesthetic_predictor_forward(x, params, *, block_b=2048):
    """x: [B, F] float32 (or bfloat16).  Returns [B, 1] float32."""
    B, F = x.shape
    w_eff, b_eff = _fold_affine(params)

    vmem_phys = _vmem_capacity_bytes()
    tb = _choose_tile(B, F, block_b, vmem_phys)
    nsteps = _cdiv(B, tb)

    # Explicit scoped-VMEM budget: double-buffered x tile + lane-padded output
    # tile + resident weight row, plus slack for compiler scratch.  Lifts the
    # v5e 16 MiB default while staying under v7x's 64 MiB physical VMEM.
    x_bytes = jnp.dtype(x.dtype).itemsize
    tile_bytes = 2 * tb * F * x_bytes + 2 * tb * 128 * 4 + 2 * 8 * F * 4
    vmem_limit = min(int(vmem_phys * 0.85), max(tile_bytes + (4 << 20), 32 << 20))

    batched = lambda i: (i, 0)     # x / output: tiled along batch
    resident = lambda i: (0, 0)    # folded weight row: one block, resident

    return pl.pallas_call(
        _affine_kernel,
        out_shape=jax.ShapeDtypeStruct((B, 1), jnp.float32),
        grid_spec=pltpu.PrefetchScalarGridSpec(
            num_scalar_prefetch=0,
            grid=(nsteps,),
            in_specs=[
                pl.BlockSpec((tb, F), batched),                      # x tile
                pl.BlockSpec((1, F), resident),                      # W_eff row
                pl.BlockSpec(memory_space=pltpu.MemorySpace.SMEM),   # b_eff scalar
            ],
            out_specs=pl.BlockSpec((tb, 1), batched),
        ),
        compiler_params=pltpu.CompilerParams(
            dimension_semantics=("parallel",),
            vmem_limit_bytes=vmem_limit,
        ),
    )(x, w_eff, b_eff)


def init_params(key, input_size):
    """nn.Linear-style init; W stored as [in, out] (transpose of PyTorch's [out, in])."""
    dims = [input_size, 1024, 128, 64, 16, 1]
    params = []
    keys = jax.random.split(key, 2 * (len(dims) - 1))
    for li in range(len(dims) - 1):
        fan_in, fan_out = dims[li], dims[li + 1]
        bound = 1.0 / jnp.sqrt(jnp.float32(fan_in))
        w = jax.random.uniform(keys[2 * li], (fan_in, fan_out),
                               jnp.float32, -bound, bound)
        b = jax.random.uniform(keys[2 * li + 1], (1, fan_out),
                               jnp.float32, -bound, bound)
        params += [w, b]
    return tuple(params)


def reference_forward(x, params):
    """Layer-by-layer reference (dropout = identity in eval mode)."""
    w1, b1, w2, b2, w3, b3, w4, b4, w5, b5 = params
    h = x
    for w, b in ((w1, b1), (w2, b2), (w3, b3), (w4, b4), (w5, b5)):
        h = h @ w + b
    return h


if __name__ == "__main__":
    key = jax.random.PRNGKey(0)
    k_params, k_x = jax.random.split(key)

    input_size = 256   # AestheticPredictor(input_size); small for the demo
    batch = 20         # not a multiple of 8 or of the tile: exercises the
                       # pad-free partial-block path (tb=16, grid=(2,))

    params = init_params(k_params, input_size)
    x = jax.random.normal(k_x, (batch, input_size), jnp.float32)

    y = aesthetic_predictor_forward(x, params)
    y = jax.block_until_ready(y)

    y_ref = reference_forward(x, params)
    assert y.shape == (batch, 1), y.shape
    max_err = float(jnp.max(jnp.abs(y - y_ref)))
    assert jnp.allclose(y, y_ref, atol=5e-4, rtol=5e-4), max_err

    print("KERNEL_OK")
</pallas_src>

<mosaic_0001>
module attributes {stable_mosaic.version = 11 : i64} {
  func.func @_affine_kernel(%arg0: i32, %arg1: memref<16x256xf32, #tpu.memory_space<vmem>>, %arg2: memref<1x256xf32, #tpu.memory_space<vmem>>, %arg3: memref<1x1xf32, #tpu.memory_space<smem>>, %arg4: memref<16x1xf32, #tpu.memory_space<vmem>>) attributes {dimension_semantics = [#tpu.dimension_semantics<parallel>], iteration_bounds = array<i64: 2>, scalar_prefetch = 0 : i64, scratch_operands = 0 : i64, tpu.core_type = #tpu.core_type<tc>, window_params = [{transform_indices = @transform_0, window_bounds = array<i64: 16, 256>}, {pipeline_mode = #tpu.pipeline_mode<synchronous>, transform_indices = @transform_1, window_bounds = array<i64: 1, 256>}, {transform_indices = @transform_2, window_bounds = array<i64: 1, 1>}, {transform_indices = @transform_3, window_bounds = array<i64: 16, 1>}]} {
    %c0 = arith.constant 0 : index
    %c0_0 = arith.constant 0 : index
    %0 = vector.load %arg1[%c0, %c0_0] : memref<16x256xf32, #tpu.memory_space<vmem>>, vector<16x256xf32>
    %c0_1 = arith.constant 0 : index
    %c0_2 = arith.constant 0 : index
    %1 = vector.load %arg2[%c0_1, %c0_2] : memref<1x256xf32, #tpu.memory_space<vmem>>, vector<1x256xf32>
    %2 = vector.broadcast %1 : vector<1x256xf32> to vector<16x256xf32>
    %3 = arith.mulf %0, %2 : vector<16x256xf32>
    %cst = arith.constant dense<0.000000e+00> : vector<16xf32>
    %4 = vector.multi_reduction <add>, %3, %cst [1] : vector<16x256xf32> to vector<16xf32>
    %5 = vector.shape_cast %4 : vector<16xf32> to vector<16x1xf32>
    %c0_3 = arith.constant 0 : index
    %c0_4 = arith.constant 0 : index
    %6 = memref.load %arg3[%c0_3, %c0_4] : memref<1x1xf32, #tpu.memory_space<smem>>
    %7 = vector.broadcast %6 : f32 to vector<16x1xf32>
    %8 = arith.addf %5, %7 : vector<16x1xf32>
    %c0_5 = arith.constant 0 : index
    %c0_6 = arith.constant 0 : index
    %9 = vector.load %arg4[%c0_5, %c0_6] : memref<16x1xf32, #tpu.memory_space<vmem>>, vector<16x1xf32>
    tpu.vector_store %arg4[%c0_5, %c0_6], %8 {strides = array<i32>} : memref<16x1xf32, #tpu.memory_space<vmem>>, vector<16x1xf32>,
    return
  }
  func.func @transform_0(%arg0: i32) -> (i32, i32) {
    %c0_i32 = arith.constant 0 : i32
    %c0_i32_0 = arith.constant 0 : i32
    return %arg0, %c0_i32 : i32, i32
  }
  func.func @transform_1(%arg0: i32) -> (i32, i32) {
    %c0_i32 = arith.constant 0 : i32
    %c0_i32_0 = arith.constant 0 : i32
    %c0_i32_1 = arith.constant 0 : i32
    return %c0_i32, %c0_i32_0 : i32, i32
  }
  func.func @transform_2(%arg0: i32) -> (i32, i32) {
    %c0_i32 = arith.constant 0 : i32
    %c0_i32_0 = arith.constant 0 : i32
    %c0_i32_1 = arith.constant 0 : i32
    return %c0_i32, %c0_i32_0 : i32, i32
  }
  func.func @transform_3(%arg0: i32) -> (i32, i32) {
    %c0_i32 = arith.constant 0 : i32
    %c0_i32_0 = arith.constant 0 : i32
    return %arg0, %c0_i32 : i32, i32
  }
}

</mosaic_0001>

<llo_original>
// kernel: aesthetic_predictor_forward.1
$region0: #{aesthetic_predictor_forward.1}
  #allocation0 [shape = 'u32[]', space=smem, size = 0x4, offset = 0x4, fixed_abs, tag = 'smem constant byte address 0x4 - core index']
  #allocation1 [shape = 'u32[72,128]{1,0:T(1,128)}', space=vmem, size = 0x9000, scoped, tag = 'internal scratch']
  #allocation2 [shape = 'f32[1,1]{1,0:T(1,128)S(6)}', space=smem, size = 0x200, scoped, tag = 'scoped memory for aesthetic_predictor_forward.1']
  %s0 = inlined_call_operand.vmem [shape: f32[20,256], index: 0, kind: input, shape index: {}]
  %s1 = inlined_call_operand.vmem [shape: f32[1,256], index: 1, kind: input, shape index: {}]
  %s2 = inlined_call_operand.<no memory space> [shape: f32[1,1], index: 2, kind: input, shape index: {}]
  %s3 = inlined_call_operand.vmem [shape: f32[20,1], index: 3, kind: output, shape index: {}]
  %s4 = sld [smem:[#allocation0]]
  $region93: #{aesthetic_predictor_forward.1} parent=0
    _
  %s6 = ssub.s32 1, %s4
  %s7 = scalar_select 0, %s6, %s4
  %8 = sst [smem:[#allocation2]] %s2
  $region1: #{aesthetic_predictor_forward.1} parent=0
    #allocation3 [shape = 'u8[16384]{0}', space=vmem, size = 0x4000, scoped, tag = 'output window, operand 0']
    loop: start=0, step=1, limit=4
    $region2: #{aesthetic_predictor_forward.1} parent=1 // loop_pre_header
      _
    $region3: #{aesthetic_predictor_forward.1} parent=1 // loop_header
      %s10 = sphi 0, %s14
      %p11 = scmp.ge.s32.totalorder %s10, 4
      %s20 = sphi 0, %s22
      %s23 = sphi 0, %s20
      %s24 = sphi 0, %s23
      %s40 = sphi 0, %s24
      %s44 = sphi 0, %s44
      %s46 = sphi 0, %s44
      %s47 = sphi 0, %s46
      %s61 = sphi 0, %s47
      %s65 = sphi 0, %s65
      %s67 = sphi 0, %s65
      %s68 = sphi 0, %s67
      %s82 = sphi 0, %s68
      %s88 = sphi 0, %s90
      %s91 = sphi 0, %s88
      %s92 = sphi 0, %s91
      %s108 = sphi 0, %s92
    $region4: #{aesthetic_predictor_forward.1} parent=1 // loop_header_branch
      %13 = sbr.rel (%p11) target = $region8
    $region5: #{aesthetic_predictor_forward.1} parent=1 // loop_body
      %s15 = ssub.s32 %s10, 1
      %s16 = ssub.s32 %s10, 2
      %s17 = sadd.s32 %s10, 1
      %s18 = ssub.s32 %s10, %s17
      %p19 = scmp.eq.s32.totalorder %s18, 0
      %s21 = sadd.s32 %s20, 1
      %s22 = scalar_select %p19, %s20, %s21
      %p25 = pneg %p19
      %p26 = scmp.eq.s32.totalorder %s10, 1
      %p27 = por %p25, %p26
      %p28 = scmp.ne.s32.totalorder %s20, %s23
      %p29 = scmp.eq.s32.totalorder %s10, 0
      %p30 = por %p28, %p29
      %p31 = scmp.ne.s32.totalorder %s20, %s23
      %p32 = scmp.eq.s32.totalorder %s15, 1
      %p33 = por %p31, %p32
      %p34 = scmp.ne.s32.totalorder %s23, %s24
      %p35 = scmp.eq.s32.totalorder %s15, 0
      %p36 = por %p34, %p35
      %p37 = scmp.ne.s32.totalorder %s23, %s24
      %p38 = scmp.eq.s32.totalorder %s16, 1
      %p39 = por %p37, %p38
      %p41 = scmp.ne.s32.totalorder %s24, %s40
      %p42 = scmp.eq.s32.totalorder %s16, 0
      %p43 = por %p41, %p42
      %s45 = sadd.s32 %s44, 1
      %p48 = scmp.eq.s32.totalorder %s10, 1
      %p49 = scmp.ne.s32.totalorder %s44, %s46
      %p50 = scmp.eq.s32.totalorder %s10, 0
      %p51 = por %p49, %p50
      %p52 = scmp.ne.s32.totalorder %s44, %s46
      %p53 = scmp.eq.s32.totalorder %s15, 1
      %p54 = por %p52, %p53
      %p55 = scmp.ne.s32.totalorder %s46, %s47
      %p56 = scmp.eq.s32.totalorder %s15, 0
      %p57 = por %p55, %p56
      %p58 = scmp.ne.s32.totalorder %s46, %s47
      %p59 = scmp.eq.s32.totalorder %s16, 1
      %p60 = por %p58, %p59
      %p62 = scmp.ne.s32.totalorder %s47, %s61
      %p63 = scmp.eq.s32.totalorder %s16, 0
      %p64 = por %p62, %p63
      %s66 = sadd.s32 %s65, 1
      %p69 = scmp.eq.s32.totalorder %s10, 1
      %p70 = scmp.ne.s32.totalorder %s65, %s67
      %p71 = scmp.eq.s32.totalorder %s10, 0
      %p72 = por %p70, %p71
      %p73 = scmp.ne.s32.totalorder %s65, %s67
      %p74 = scmp.eq.s32.totalorder %s15, 1
      %p75 = por %p73, %p74
      %p76 = scmp.ne.s32.totalorder %s67, %s68
      %p77 = scmp.eq.s32.totalorder %s15, 0
      %p78 = por %p76, %p77
      %p79 = scmp.ne.s32.totalorder %s67, %s68
      %p80 = scmp.eq.s32.totalorder %s16, 1
      %p81 = por %p79, %p80
      %p83 = scmp.ne.s32.totalorder %s68, %s82
      %p84 = scmp.eq.s32.totalorder %s16, 0
      %p85 = por %p83, %p84
      %s86 = ssub.s32 %s10, %s17
      %p87 = scmp.eq.s32.totalorder %s86, 0
      %s89 = sadd.s32 %s88, 1
      %s90 = scalar_select %p87, %s88, %s89
      %p93 = pneg %p87
      %p94 = scmp.eq.s32.totalorder %s10, 1
      %p95 = por %p93, %p94
      %p96 = scmp.ne.s32.totalorder %s88, %s91
      %p97 = scmp.eq.s32.totalorder %s10, 0
      %p98 = por %p96, %p97
      %p99 = scmp.ne.s32.totalorder %s88, %s91
      %p100 = scmp.eq.s32.totalorder %s15, 1
      %p101 = por %p99, %p100
      %p102 = scmp.ne.s32.totalorder %s91, %s92
      %p103 = scmp.eq.s32.totalorder %s15, 0
      %p104 = por %p102, %p103
      %p105 = scmp.ne.s32.totalorder %s91, %s92
      %p106 = scmp.eq.s32.totalorder %s16, 1
      %p107 = por %p105, %p106
      %p109 = scmp.ne.s32.totalorder %s92, %s108
      %p110 = scmp.eq.s32.totalorder %s16, 0
      %p111 = por %p109, %p110
      %p112 = scmp.le.s32.totalorder 1, %s10
      %p113 = scmp.lt.s32.totalorder %s10, 3
      %p114 = pnand %p112, %p113
      %p115 = pneg %p114
      // Predicated region
      $region9: #{aesthetic_predictor_forward.1} parent=5 // pred_check
        _
      $region10: #{aesthetic_predictor_forward.1} parent=5 // pred_check_branch
        %117 = sbr.rel (%p114) target = $region12
      $region11: #{aesthetic_predictor_forward.1} parent=5 // pred_region
        %s118 = ssub.s32 %s10, 1
        // Predicated region
        $region13: #{aesthetic_predictor_forward.1} parent=11 // pred_check
          %p119 = pneg %p57
        $region14: #{aesthetic_predictor_forward.1} parent=11 // pred_check_branch
          %121 = sbr.rel (%p119) target = $region16
        $region15: #{aesthetic_predictor_forward.1} parent=11 // pred_region
          _
        $region16: #{aesthetic_predictor_forward.1} parent=11 // pred_fallthru
          _
        // Predicated region
        $region17: #{aesthetic_predictor_forward.1} parent=11 // pred_check
          %p122 = pneg %p78
        $region18: #{aesthetic_predictor_forward.1} parent=11 // pred_check_branch
          %124 = sbr.rel (%p122) target = $region20
        $region19: #{aesthetic_predictor_forward.1} parent=11 // pred_region
          _
        $region20: #{aesthetic_predictor_forward.1} parent=11 // pred_fallthru
          _
      $region12: #{aesthetic_predictor_forward.1} parent=5 // pred_fallthru
        _
      %p125 = scmp.lt.s32.totalorder %s10, 2
      // Predicated region
      $region21: #{aesthetic_predictor_forward.1} parent=5 // pred_check
        %p126 = pneg %p125
      $region22: #{aesthetic_predictor_forward.1} parent=5 // pred_check_branch
        %128 = sbr.rel (%p126) target = $region24
      $region23: #{aesthetic_predictor_forward.1} parent=5 // pred_region
        // Predicated region
        $region25: #{aesthetic_predictor_forward.1} parent=23 // pred_check
          %p129 = pneg %p30
        $region26: #{aesthetic_predictor_forward.1} parent=23 // pred_check_branch
          %131 = sbr.rel (%p129) target = $region28
        $region27: #{aesthetic_predictor_forward.1} parent=23 // pred_region
          %s132 = smul.u32 2, %s10
          %s133 = ssub.s32 3, %s132
          %p134 = scmp.lt.s32.totalorder %s133, 2
          %s135 = scalar_select %p134, %s133, 2
          %s136 = smul.u32 8, %s135
          %s137 = smul.u32 %s136, 2
          %p138 = scmp.lt.s32.totalorder %s132, 2
          %s139 = scalar_select %p138, %s132, 2
          %s140 = smul.addr %s139, 2
          %s141 = smul.addr %s140, 8
          %s142 = scalar_lea.vmem %s0, %s141
          %s143 = smul.u32 2, %s10
          %s144 = ssub.s32 3, %s143
          %p145 = scmp.lt.s32.totalorder %s144, 2
          %s146 = scalar_select %p145, %s144, 2
          %s147 = smul.u32 8, %s146
          %s148 = smul.u32 %s147, 2
        $region28: #{aesthetic_predictor_forward.1} parent=23 // pred_fallthru
          _
      $region24: #{aesthetic_predictor_forward.1} parent=5 // pred_fallthru
        _
      %p149 = scmp.le.s32.totalorder 1, %s10
      %p150 = scmp.lt.s32.totalorder %s10, 3
      %p151 = pnand %p149, %p150
      %p152 = pneg %p151
      // Predicated region
      $region29: #{aesthetic_predictor_forward.1} parent=5 // pred_check
        _
      $region30: #{aesthetic_predictor_forward.1} parent=5 // pred_check_branch
        %154 = sbr.rel (%p151) target = $region32
      $region31: #{aesthetic_predictor_forward.1} parent=5 // pred_region
        %s155 = ssub.s32 %s10, 1
        %s156 = smul.u32 2, %s15
        %s157 = ssub.s32 3, %s156
        %p158 = scmp.lt.s32.totalorder %s157, 2
        %s159 = scalar_select %p158, %s157, 2
        %s160 = smul.u32 8, %s159
        %s161 = smul.u32 %s160, 2
        %p162 = scmp.lt.s32.totalorder %s156, 2
        %s163 = scalar_select %p162, %s156, 2
        %s164 = smul.addr %s163, 2
        %s165 = smul.addr %s164, 8
        %s166 = scalar_lea.vmem %s0, %s165
        %p167 = pneg %p36
        %p168 = pneg %p33
        %p169 = pneg %p57
        %p170 = pneg %p54
        %p171 = pneg %p78
        %p172 = pneg %p75
        %p173 = pneg %p104
        %p174 = pneg %p101
        %s175 = sand.u32 %s91, 1
        %s176 = sand.u32 %s91, 1
        %s177 = smul.addr %s176, 16
        %s178 = scalar_lea.vmem [#allocation3], %s177
        %s179 = smul.u32 2, %s15
        %s180 = ssub.s32 3, %s179
        %p181 = scmp.lt.s32.totalorder %s180, 2
        %s182 = scalar_select %p181, %s180, 2
        %s183 = smul.u32 8, %s182
        %s184 = smul.u32 %s183, 2
        %p185 = scmp.lt.s32.totalorder %s179, 2
        %s186 = scalar_select %p185, %s179, 2
        %s187 = smul.addr %s186, 2
        %s188 = smul.addr %s187, 8
        %s189 = scalar_lea.vmem %s0, %s188
        %s190 = smul.u32 2, %s15
        %s191 = ssub.s32 3, %s190
        %p192 = scmp.lt.s32.totalorder %s191, 2
        %s193 = scalar_select %p192, %s191, 2
        %s194 = smul.u32 8, %s193
        %s195 = smul.u32 %s194, 2
        %s196 = smul.u32 2, %s15
        %s197 = ssub.s32 3, %s196
        %p198 = scmp.lt.s32.totalorder %s197, 2
        %s199 = scalar_select %p198, %s197, 2
        %s200 = smul.u32 8, %s199
        %v201 = vld [vmem:[%s189] sm:$0xff]
        %v202 = vld [vmem:[%s189 + $0x8] sm:$0xff]
        %v203 = vld [vmem:[%s189 + $0x10] sm:$0xff]
        %v204 = vld [vmem:[%s189 + $0x18] sm:$0xff]
        %v205 = vld [vmem:[%s1] sm:$0x3]
        %v207 = vperm.slane %v205, 0
        %v208 = vperm.slane %v205, 1
        %v211 = vmul.f32 %v201, %v207
        %v212 = vmul.f32 %v202, %v208
        %v213 = vmul.f32 %v203, %v207
        %v214 = vmul.f32 %v204, %v208
        %v215 = vadd.f32 %v211, %v212
        %216 = vadd.xlane.f32.xlu0 %v215
        %v217 = vpop.xlane.xlu0 %216
        %v218 = vadd.f32 %v213, %v214
        %219 = vadd.xlane.f32.xlu0 %v218
        %v220 = vpop.xlane.xlu0 %219
        %s221 = sld [smem:[#allocation2]]
        %v222 = vstv %s221
        %v223 = vadd.f32 %v217, %v222
        %v224 = vadd.f32 %v220, %v222
        %vm225 = vcmask 7168
        %226 = vst.msk [vmem:[%s178] sm:$0xff] %vm225, %v223
        %227 = vst.msk [vmem:[%s178 + $0x8] sm:$0xff] %vm225, %v224
        %s228 = sand.u32 %s91, 1
        %s229 = sand.u32 %s91, 1
        %s230 = smul.addr %s229, 16
        %s231 = scalar_lea.vmem [#allocation3], %s230
        // Predicated region
        $region33: #{aesthetic_predictor_forward.1} parent=31 // pred_check
          %p232 = pneg %p101
        $region34: #{aesthetic_predictor_forward.1} parent=31 // pred_check_branch
          %234 = sbr.rel (%p232) target = $region36
        $region35: #{aesthetic_predictor_forward.1} parent=31 // pred_region
          %s235 = smul.u32 2, %s15
          %s236 = ssub.s32 3, %s235
          %p237 = scmp.lt.s32.totalorder %s236, 2
          %s238 = scalar_select %p237, %s236, 2
          %s239 = smul.u32 8, %s238
          %p240 = scmp.ne.s32.totalorder 0, %s239
          %s241 = smul.addr %s235, 8
          %s242 = scalar_lea.vmem %s3, %s241
          // Predicated region
          $region37: #{aesthetic_predictor_forward.1} parent=35 // pred_check
            %p243 = pneg %p240
          $region38: #{aesthetic_predictor_forward.1} parent=35 // pred_check_branch
            %245 = sbr.rel (%p243) target = $region40
          $region39: #{aesthetic_predictor_forward.1} parent=35 // pred_region
            // Predicated region
            $region41: #{aesthetic_predictor_forward.1} parent=39 // pred_check
              _
            $region42: #{aesthetic_predictor_forward.1} parent=39 // pred_check_branch
              %247 = sbr.rel (0) target = $region44
            $region43: #{aesthetic_predictor_forward.1} parent=39 // pred_region
              // Predicated region
              $region63: #{aesthetic_predictor_forward.1} parent=43 // pred_check
                _
              $region64: #{aesthetic_predictor_forward.1} parent=43 // pred_check_branch
                %299 = sbr.rel (0) target = $region66
              $region65: #{aesthetic_predictor_forward.1} parent=43 // pred_region
                %s300 = sshrl.u32 %s238, 1
                // While loop
                $region67: #{aesthetic_predictor_forward.1} parent=65 // loop_pre_header
                  _
                $region68: #{aesthetic_predictor_forward.1} parent=65 // loop_header
                  %s302 = sphi 0, %s304
                  %p303 = scmp.ge.s32.totalorder %s302, %s300
                  %s307 = sphi 0, %s316
                  %s308 = sphi %s231, %s319
                  %s309 = sphi %s242, %s320
                $region69: #{aesthetic_predictor_forward.1} parent=65 // loop_header_branch
                  %306 = sbr.rel (%p303) target = $region73
                $region70: #{aesthetic_predictor_forward.1} parent=65 // loop_body
                  %v310 = vld [vmem:[%s308] sm:$0xff]
                  %311 = vst [vmem:[%s309] sm:$0xff] %v310
                  %v312 = vld [vmem:[%s308 + $0x8] sm:$0xff]
                  %313 = vst [vmem:[%s309 + $0x8] sm:$0xff] %v312
                  %s314 = sadd.s32 1, %s307
                  %p315 = scmp.ge.s32.totalorder %s314, %s300
                  %s316 = scalar_select %p315, 0, %s314
                  %s317 = smul.u32 %s316, 16
                  %s318 = smul.u32 %s316, 16
                  %s319 = scalar_lea.vmem %s231, %s317 [#allocation3]
                  %s320 = scalar_lea.vmem %s242, %s318
                $region71: #{aesthetic_predictor_forward.1} parent=65 // loop_footer
                  %s304 = sadd.s32 %s302, 1
                $region72: #{aesthetic_predictor_forward.1} parent=65 // loop_footer_branch
                  %301 = sbr.rel target = $region68
                $region73: #{aesthetic_predictor_forward.1} parent=65 // loop_exit
                  _
                %s321 = sshrl.u32 %s238, 1
                %s322 = sand.u32 %s238, 1
                %s323 = smul.u32 %s321, 2
                %s324 = smul.u32 8, %s323
                %s325 = scalar_lea.vmem %s231, %s324 [#allocation3]
                %s326 = smul.u32 8, %s323
                %s327 = scalar_lea.vmem %s242, %s326
                // While loop
                $region74: #{aesthetic_predictor_forward.1} parent=65 // loop_pre_header
                  _
                $region75: #{aesthetic_predictor_forward.1} parent=65 // loop_header
                  %s329 = sphi 0, %s331
                  %p330 = scmp.ge.s32.totalorder %s329, %s322
                  %s334 = sphi 0, %s341
                  %s335 = sphi %s325, %s344
                  %s336 = sphi %s327, %s345
                $region76: #{aesthetic_predictor_forward.1} parent=65 // loop_header_branch
                  %333 = sbr.rel (%p330) target = $region80
                $region77: #{aesthetic_predictor_forward.1} parent=65 // loop_body
                  %v337 = vld [vmem:[%s335] sm:$0xff]
                  %338 = vst [vmem:[%s336] sm:$0xff] %v337
                  %s339 = sadd.s32 1, %s334
                  %p340 = scmp.ge.s32.totalorder %s339, %s322
                  %s341 = scalar_select %p340, 0, %s339
                  %s342 = smul.u32 %s341, 8
                  %s343 = smul.u32 %s341, 8
                  %s344 = scalar_lea.vmem %s325, %s342 [#allocation3]
                  %s345 = scalar_lea.vmem %s327, %s343
                $region78: #{aesthetic_predictor_forward.1} parent=65 // loop_footer
                  %s331 = sadd.s32 %s329, 1
                $region79: #{aesthetic_predictor_forward.1} parent=65 // loop_footer_branch
                  %328 = sbr.rel target = $region75
                $region80: #{aesthetic_predictor_forward.1} parent=65 // loop_exit
                  _
              $region66: #{aesthetic_predictor_forward.1} parent=43 // pred_fallthru
                _
              // Predicated region
              $region81: #{aesthetic_predictor_forward.1} parent=43 // pred_check
                _
              $region82: #{aesthetic_predictor_forward.1} parent=43 // pred_check_branch
                %347 = sbr.rel target = $region84
              $region83: #{aesthetic_predictor_forward.1} parent=43 // pred_region
                _
              $region84: #{aesthetic_predictor_forward.1} parent=43 // pred_fallthru
                _
            $region44: #{aesthetic_predictor_forward.1} parent=39 // pred_fallthru
              _
            // Predicated region
            $region45: #{aesthetic_predictor_forward.1} parent=39 // pred_check
              _
            $region46: #{aesthetic_predictor_forward.1} parent=39 // pred_check_branch
              %249 = sbr.rel target = $region48
            $region47: #{aesthetic_predictor_forward.1} parent=39 // pred_region
              %s251 = ssub.s32 256, 1
              %s252 = sshrl.u32 %s238, 1
              // While loop
              $region49: #{aesthetic_predictor_forward.1} parent=47 // loop_pre_header
                _
              $region50: #{aesthetic_predictor_forward.1} parent=47 // loop_header
                %s254 = sphi 0, %s256
                %p255 = scmp.ge.s32.totalorder %s254, %s252
                %s259 = sphi 0, %s268
                %s260 = sphi %s231, %s271
                %s261 = sphi %s242, %s272
              $region51: #{aesthetic_predictor_forward.1} parent=47 // loop_header_branch
                %258 = sbr.rel (%p255) target = $region55
              $region52: #{aesthetic_predictor_forward.1} parent=47 // loop_body
                %v262 = vld [vmem:[%s260] sm:%s251]
                %263 = vst [vmem:[%s261] sm:%s251] %v262
                %v264 = vld [vmem:[%s260 + $0x8] sm:%s251]
                %265 = vst [vmem:[%s261 + $0x8] sm:%s251] %v264
                %s266 = sadd.s32 1, %s259
                %p267 = scmp.ge.s32.totalorder %s266, %s252
                %s268 = scalar_select %p267, 0, %s266
                %s269 = smul.u32 %s268, 16
                %s270 = smul.u32 %s268, 16
                %s271 = scalar_lea.vmem %s231, %s269 [#allocation3]
                %s272 = scalar_lea.vmem %s242, %s270
              $region53: #{aesthetic_predictor_forward.1} parent=47 // loop_footer
                %s256 = sadd.s32 %s254, 1
              $region54: #{aesthetic_predictor_forward.1} parent=47 // loop_footer_branch
                %253 = sbr.rel target = $region50
              $region55: #{aesthetic_predictor_forward.1} parent=47 // loop_exit
                _
              %s273 = sshrl.u32 %s238, 1
              %s274 = sand.u32 %s238, 1
              %s275 = smul.u32 %s273, 2
              %s276 = smul.u32 8, %s275
              %s277 = scalar_lea.vmem %s231, %s276 [#allocation3]
              %s278 = smul.u32 8, %s275
              %s279 = scalar_lea.vmem %s242, %s278
              // While loop
              $region56: #{aesthetic_predictor_forward.1} parent=47 // loop_pre_header
                _
              $region57: #{aesthetic_predictor_forward.1} parent=47 // loop_header
                %s281 = sphi 0, %s283
                %p282 = scmp.ge.s32.totalorder %s281, %s274
                %s286 = sphi 0, %s293
                %s287 = sphi %s277, %s296
                %s288 = sphi %s279, %s297
              $region58: #{aesthetic_predictor_forward.1} parent=47 // loop_header_branch
                %285 = sbr.rel (%p282) target = $region62
              $region59: #{aesthetic_predictor_forward.1} parent=47 // loop_body
                %v289 = vld [vmem:[%s287] sm:%s251]
                %290 = vst [vmem:[%s288] sm:%s251] %v289
                %s291 = sadd.s32 1, %s286
                %p292 = scmp.ge.s32.totalorder %s291, %s274
                %s293 = scalar_select %p292, 0, %s291
                %s294 = smul.u32 %s293, 8
                %s295 = smul.u32 %s293, 8
                %s296 = scalar_lea.vmem %s277, %s294 [#allocation3]
                %s297 = scalar_lea.vmem %s279, %s295
              $region60: #{aesthetic_predictor_forward.1} parent=47 // loop_footer
                %s283 = sadd.s32 %s281, 1
              $region61: #{aesthetic_predictor_forward.1} parent=47 // loop_footer_branch
                %280 = sbr.rel target = $region57
              $region62: #{aesthetic_predictor_forward.1} parent=47 // loop_exit
                _
            $region48: #{aesthetic_predictor_forward.1} parent=39 // pred_fallthru
              _
          $region40: #{aesthetic_predictor_forward.1} parent=35 // pred_fallthru
            _
          %348 = vnop
        $region36: #{aesthetic_predictor_forward.1} parent=31 // pred_fallthru
          _
      $region32: #{aesthetic_predictor_forward.1} parent=5 // pred_fallthru
        _
      %p349 = scmp.le.s32.totalorder 2, %s10
      // Predicated region
      $region85: #{aesthetic_predictor_forward.1} parent=5 // pred_check
        %p350 = pneg %p349
      $region86: #{aesthetic_predictor_forward.1} parent=5 // pred_check_branch
        %352 = sbr.rel (%p350) target = $region88
      $region87: #{aesthetic_predictor_forward.1} parent=5 // pred_region
        %s353 = ssub.s32 %s10, 2
        // Predicated region
        $region89: #{aesthetic_predictor_forward.1} parent=87 // pred_check
          %p354 = pneg %p107
        $region90: #{aesthetic_predictor_forward.1} parent=87 // pred_check_branch
          %356 = sbr.rel (%p354) target = $region92
        $region91: #{aesthetic_predictor_forward.1} parent=87 // pred_region
          %s357 = sand.u32 %s92, 1
          %s358 = sand.u32 %s92, 1
          %s359 = smul.addr %s358, 16
          %s360 = scalar_lea.vmem [#allocation3], %s359
        $region92: #{aesthetic_predictor_forward.1} parent=87 // pred_fallthru
          _
      $region88: #{aesthetic_predictor_forward.1} parent=5 // pred_fallthru
        _
    $region6: #{aesthetic_predictor_forward.1} parent=1 // loop_footer
      %s14 = sadd.s32 1, %s10
    $region7: #{aesthetic_predictor_forward.1} parent=1 // loop_footer_branch
      %9 = sbr.rel target = $region3
    $region8: #{aesthetic_predictor_forward.1} parent=1 // loop_exit
      _

</llo_original>
